<compile_context>
chip_gen: v7x
topology: tpu7x:2x2x1
jax: 0.10.0
libtpu: 0.0.40
codegen_flags: <defaults>
</compile_context>

<pallas_src>
import jax
import jax.numpy as jnp
from jax.experimental import pallas as pl
from jax.experimental.pallas import tpu as pltpu


def _round_up(x, m):
    return ((x + m - 1) // m) * m


# ---------------------------------------------------------------------------
# Kernel: one row-tile of flattened patches @ projection weight + bias.
# ---------------------------------------------------------------------------
def _patch_embed_kernel(p_ref, w_ref, b_ref, o_ref):
    # p_ref: (TM, K)   row-tile of flattened patches (compute dtype)
    # w_ref: (K, Dp)   projection weight, grid-invariant
    # b_ref: (1, Dp)   bias, grid-invariant, f32
    # o_ref: (TM, Dp)  output tile (lane-dense last dim)
    acc = jnp.dot(p_ref[...], w_ref[...], preferred_element_type=jnp.float32)
    acc = acc + b_ref[...]
    o_ref[...] = acc.astype(o_ref.dtype)


def _vmem_capacity_bytes():
    # Host-side (trace-time) hardware query; safe fallback = v7x per-core VMEM.
    try:
        return int(pltpu.get_tpu_info().vmem_capacity_bytes)
    except Exception:
        return 64 * 1024 * 1024


def _per_step_bytes(tm, K, Dp, in_item, out_item):
    # double-buffered patch + output tiles, double-buffered weight/bias
    return (2 * tm * K * in_item + 2 * tm * Dp * out_item
            + 2 * (K * Dp * in_item + Dp * 4))


def _choose_tm(M, K, Dp, in_item, out_item, tm_max, vmem_budget):
    # Keep >= 8 grid steps (>= 4 per v7x TensorCore) so both cores pipeline,
    # while letting TM grow toward tm_max for large B*N (amortizes the
    # ~0.35us per-grid-step overhead in this memory-bound kernel).
    TM = min(_round_up(max(tm_max, 8), 8), _round_up(pl.cdiv(M, 8), 8))
    while TM > 8 and _per_step_bytes(TM, K, Dp, in_item, out_item) > vmem_budget // 2:
        TM = _round_up(TM // 2, 8)
    TM = max(8, TM)
    # Prefer a TM that divides M (no wasted padded grid step), if one exists
    # within 2x of the target.
    if M % TM != 0:
        for t in range(TM, max(8, TM // 2) - 1, -8):
            if M % t == 0:
                TM = t
                break
    return TM


def _build_call(Mp, K, Dp, TM, in_dtype, out_dtype, vmem_limit):
    grid = (Mp // TM,)
    in_item = jnp.dtype(in_dtype).itemsize
    out_item = jnp.dtype(out_dtype).itemsize
    flops = 2 * Mp * K * Dp
    bytes_accessed = (Mp * K * in_item + K * Dp * in_item + Dp * 4
                      + Mp * Dp * out_item)
    return pl.pallas_call(
        _patch_embed_kernel,
        out_shape=jax.ShapeDtypeStruct((Mp, Dp), out_dtype),
        grid=grid,
        in_specs=[
            pl.BlockSpec((TM, K), lambda i: (i, 0)),   # patch row-tile
            pl.BlockSpec((K, Dp), lambda i: (0, 0)),   # weight (grid-invariant)
            pl.BlockSpec((1, Dp), lambda i: (0, 0)),   # bias   (grid-invariant)
        ],
        out_specs=pl.BlockSpec((TM, Dp), lambda i: (i, 0)),
        compiler_params=pltpu.CompilerParams(
            dimension_semantics=("parallel",),
            vmem_limit_bytes=vmem_limit,
            # Let XLA fuse the patch-extraction reshape/transpose producer into
            # the kernel's input DMA instead of materializing it in HBM.
            allow_input_fusion=[True, False, False],
        ),
        cost_estimate=pl.CostEstimate(
            flops=flops, transcendentals=0, bytes_accessed=bytes_accessed),
    )


# ---------------------------------------------------------------------------
# One-time parameter preprocessing (hoisted out of the forward pass).
# ---------------------------------------------------------------------------
def prepare_patch_embed_params(weight, bias, compute_dtype=jnp.bfloat16):
    """weight: (D, C, ph, pw), bias: (D,) ->
       w_mat: (K, Dp) in compute_dtype, b_row: (1, Dp) in f32 (Dp = ceil(D/128)*128)."""
    D = weight.shape[0]
    K = weight.shape[1] * weight.shape[2] * weight.shape[3]
    Dp = _round_up(D, 128)
    w_mat = weight.reshape(D, K).T.astype(compute_dtype)        # (K, D)
    w_mat = jnp.pad(w_mat, ((0, 0), (0, Dp - D)))
    b_row = jnp.pad(bias.astype(jnp.float32).reshape(1, D), ((0, 0), (0, Dp - D)))
    return w_mat, b_row


def patch_embed_apply(x, w_mat, b_row, patch_size, embed_dim, *,
                      out_dtype=None, tm=1024):
    """Forward with pre-prepared params.  x: (B, C, H, W) or (B, H, W).
    Returns (B, num_patches, embed_dim) in out_dtype (default: x.dtype)."""
    if x.ndim == 3:                           # mirrors torch's unsqueeze(1)
        x = x[:, None, :, :]
    B, C, H, W = x.shape
    ph, pw = patch_size
    Gh, Gw = H // ph, W // pw
    N = Gh * Gw
    K, Dp = w_mat.shape
    assert K == C * ph * pw, "weight / patch_size / channels mismatch"
    D = embed_dim
    out_dtype = jnp.dtype(out_dtype) if out_dtype is not None else x.dtype
    in_dtype = w_mat.dtype                    # compute dtype is set by the weights

    M = B * N
    in_item = jnp.dtype(in_dtype).itemsize
    out_item = jnp.dtype(out_dtype).itemsize
    vmem_cap = _vmem_capacity_bytes()
    vmem_budget = int(vmem_cap * 3 // 4)      # <= ~48 MiB on v7x, ~96 MiB on v5e/v6e
    TM = _choose_tm(M, K, Dp, in_item, out_item, tm, vmem_budget)
    Mp = _round_up(M, TM)
    vmem_limit = max(32 * 1024 * 1024,
                     min(vmem_budget, 4 * _per_step_bytes(TM, K, Dp, in_item, out_item)))

    # Patch extraction + flatten: layout plumbing only (fusable into input DMA).
    # TODO(synk): if xprof shows the fused transpose DMA is descriptor-bound,
    # read contiguous (1, C, ph, W) image row-slabs per block and do the patch
    # rearrangement in-kernel on the XLU instead.
    patches = x.reshape(B, C, Gh, ph, Gw, pw)
    patches = jnp.transpose(patches, (0, 2, 4, 1, 3, 5))      # (B,Gh,Gw,C,ph,pw)
    patches = patches.reshape(M, K).astype(in_dtype)
    if Mp != M:
        patches = jnp.pad(patches, ((0, Mp - M), (0, 0)))

    call = _build_call(Mp, K, Dp, TM, in_dtype, out_dtype, vmem_limit)
    out2d = call(patches, w_mat, b_row)
    return out2d[:M, :D].reshape(B, N, D)


def patch_embed(x, weight, bias, patch_size, *, compute_dtype=None,
                out_dtype=None, tm=1024):
    """One-shot forward (prepares params internally; prefer preparing once)."""
    if compute_dtype is None:
        # bf16 compute is the fast path for f32 inputs (memory-bound kernel);
        # accumulation stays f32 inside the kernel.
        compute_dtype = jnp.bfloat16 if x.dtype == jnp.float32 else x.dtype
    w_mat, b_row = prepare_patch_embed_params(weight, bias, compute_dtype)
    return patch_embed_apply(x, w_mat, b_row, patch_size, weight.shape[0],
                             out_dtype=out_dtype, tm=tm)


if __name__ == "__main__":
    # Module defaults: img_size=(256,128), patch_size=(16,16), in_chans=1,
    # embed_dim=512 -> grid_size=(16,8), num_patches=128, K=256, M=B*N=256.
    B, C = 2, 1
    img_size = (256, 128)
    patch_size = (16, 16)
    embed_dim = 512

    key = jax.random.PRNGKey(0)
    kx, kw, kb = jax.random.split(key, 3)
    x = jax.random.normal(kx, (B, C, *img_size), dtype=jnp.float32)
    weight = jax.random.normal(kw, (embed_dim, C, *patch_size), dtype=jnp.float32) * 0.02
    bias = jax.random.normal(kb, (embed_dim,), dtype=jnp.float32) * 0.1

    # Weights prepared once (hoisted out of the per-call path), forward jitted.
    w_mat, b_row = prepare_patch_embed_params(weight, bias)          # bf16 fast path
    fwd = jax.jit(patch_embed_apply, static_argnames=("patch_size", "embed_dim"))
    out = jax.block_until_ready(fwd(x, w_mat, b_row, patch_size, embed_dim))

    # Reference = PyTorch forward: strided conv + bias, flatten(2), transpose(1, 2).
    ref = jax.lax.conv_general_dilated(
        x, weight, window_strides=patch_size, padding="VALID",
        dimension_numbers=("NCHW", "OIHW", "NCHW"))
    ref = ref + bias.reshape(1, embed_dim, 1, 1)
    ref = jnp.transpose(ref.reshape(B, embed_dim, -1), (0, 2, 1))

    num_patches = (img_size[0] // patch_size[0]) * (img_size[1] // patch_size[1])
    assert out.shape == (B, num_patches, embed_dim)
    max_err = float(jnp.max(jnp.abs(out - ref)))
    assert jnp.allclose(out, ref, atol=3e-2, rtol=3e-2), max_err

    # 3-D input path (torch's unsqueeze(1)) gives the identical result.
    out3 = jax.block_until_ready(fwd(x[:, 0], w_mat, b_row, patch_size, embed_dim))
    assert jnp.allclose(out3, out, atol=1e-5, rtol=1e-5)

    # bf16 output path (halves writeback bytes for bf16 consumers).
    out_bf16 = jax.block_until_ready(
        patch_embed(x, weight, bias, patch_size, out_dtype=jnp.bfloat16))
    assert out_bf16.dtype == jnp.bfloat16
    assert jnp.allclose(out_bf16.astype(jnp.float32), ref, atol=1e-1, rtol=1e-1)

    print("KERNEL_OK")
</pallas_src>

<mosaic_0001>
module attributes {stable_mosaic.version = 11 : i64} {
  func.func @_patch_embed_kernel(%arg0: i32, %arg1: memref<32x256xbf16, #tpu.memory_space<vmem>>, %arg2: memref<256x512xbf16, #tpu.memory_space<vmem>>, %arg3: memref<1x512xf32, #tpu.memory_space<vmem>>, %arg4: memref<32x512xf32, #tpu.memory_space<vmem>>) attributes {dimension_semantics = [#tpu.dimension_semantics<parallel>], iteration_bounds = array<i64: 8>, scalar_prefetch = 0 : i64, scratch_operands = 0 : i64, tpu.core_type = #tpu.core_type<tc>, window_params = [{transform_indices = @transform_0, window_bounds = array<i64: 32, 256>}, {pipeline_mode = #tpu.pipeline_mode<synchronous>, transform_indices = @transform_1, window_bounds = array<i64: 256, 512>}, {pipeline_mode = #tpu.pipeline_mode<synchronous>, transform_indices = @transform_2, window_bounds = array<i64: 1, 512>}, {transform_indices = @transform_3, window_bounds = array<i64: 32, 512>}]} {
    %c0 = arith.constant 0 : index
    %c0_0 = arith.constant 0 : index
    %0 = vector.load %arg1[%c0, %c0_0] : memref<32x256xbf16, #tpu.memory_space<vmem>>, vector<32x256xbf16>
    %c0_1 = arith.constant 0 : index
    %c0_2 = arith.constant 0 : index
    %1 = vector.load %arg2[%c0_1, %c0_2] : memref<256x512xbf16, #tpu.memory_space<vmem>>, vector<256x512xbf16>
    %cst = arith.constant dense<0.000000e+00> : vector<32x512xf32>
    %2 = tpu.matmul %0, %1, %cst {dimension_numbers = #tpu.dot_dimension_numbers<[1], [0], [0], [1], [0, 0, 1, 1], [], []>} : vector<32x256xbf16>, vector<256x512xbf16>, vector<32x512xf32> -> vector<32x512xf32>
    %c0_3 = arith.constant 0 : index
    %c0_4 = arith.constant 0 : index
    %3 = vector.load %arg3[%c0_3, %c0_4] : memref<1x512xf32, #tpu.memory_space<vmem>>, vector<1x512xf32>
    %4 = vector.broadcast %3 : vector<1x512xf32> to vector<32x512xf32>
    %5 = arith.addf %2, %4 : vector<32x512xf32>
    %c0_5 = arith.constant 0 : index
    %c0_6 = arith.constant 0 : index
    %6 = vector.load %arg4[%c0_5, %c0_6] : memref<32x512xf32, #tpu.memory_space<vmem>>, vector<32x512xf32>
    tpu.vector_store %arg4[%c0_5, %c0_6], %5 {strides = array<i32>} : memref<32x512xf32, #tpu.memory_space<vmem>>, vector<32x512xf32>,
    return
  }
  func.func @transform_0(%arg0: i32) -> (i32, i32) {
    %c0_i32 = arith.constant 0 : i32
    %c0_i32_0 = arith.constant 0 : i32
    return %arg0, %c0_i32 : i32, i32
  }
  func.func @transform_1(%arg0: i32) -> (i32, i32) {
    %c0_i32 = arith.constant 0 : i32
    %c0_i32_0 = arith.constant 0 : i32
    %c0_i32_1 = arith.constant 0 : i32
    return %c0_i32, %c0_i32_0 : i32, i32
  }
  func.func @transform_2(%arg0: i32) -> (i32, i32) {
    %c0_i32 = arith.constant 0 : i32
    %c0_i32_0 = arith.constant 0 : i32
    %c0_i32_1 = arith.constant 0 : i32
    return %c0_i32, %c0_i32_0 : i32, i32
  }
  func.func @transform_3(%arg0: i32) -> (i32, i32) {
    %c0_i32 = arith.constant 0 : i32
    %c0_i32_0 = arith.constant 0 : i32
    return %arg0, %c0_i32 : i32, i32
  }
}

</mosaic_0001>

<llo_original>
// kernel: patch_embed_apply.1
$region0: #{patch_embed_apply.1}
  #allocation0 [shape = 'u32[]', space=smem, size = 0x4, offset = 0x4, fixed_abs, tag = 'smem constant byte address 0x4 - core index']
  #allocation1 [shape = 'u32[144,128]{1,0:T(1,128)}', space=vmem, size = 0x12000, scoped, tag = 'internal scratch']
  %s0 = inlined_call_operand.vmem [shape: bf16[256,256], index: 0, kind: input, shape index: {}]
  %s1 = inlined_call_operand.vmem [shape: bf16[256,512], index: 1, kind: input, shape index: {}]
  %s2 = inlined_call_operand.vmem [shape: f32[1,512], index: 2, kind: input, shape index: {}]
  %s3 = inlined_call_operand.hbm [shape: f32[256,512], index: 3, kind: output, shape index: {}]
  %s4 = sld [smem:[#allocation0]]
  $region45: #{patch_embed_apply.1} parent=0
    _
  %s6 = ssub.s32 1, %s4
  %s7 = scalar_select 0, %s6, %s4
  $region1: #{patch_embed_apply.1} parent=0
    #allocation2 [shape = 'u8[131072]{0}', space=vmem, size = 0x20000, scoped, tag = 'output window, operand 0']
    #allocation3 [shape = 's32[2]{0}', space=sflag, size = 0x8, scoped, tag = 'scoped memory for patch_embed_apply.1']
    %8 = vsyncpa [#allocation3], 0
    %s9 = scalar_lea.sflag [#allocation3], 1
    %10 = vsyncpa %s9, 0
    loop: start=0, step=1, limit=10
    $region2: #{patch_embed_apply.1} parent=1 // loop_pre_header
      _
    $region3: #{patch_embed_apply.1} parent=1 // loop_header
      %s12 = sphi 0, %s16
      %p13 = scmp.ge.s32.totalorder %s12, 10
      %s22 = sphi 0, %s24
      %s25 = sphi 0, %s22
      %s26 = sphi 0, %s25
      %s42 = sphi 0, %s26
      %s46 = sphi 0, %s46
      %s48 = sphi 0, %s46
      %s49 = sphi 0, %s48
      %s63 = sphi 0, %s49
      %s67 = sphi 0, %s67
      %s69 = sphi 0, %s67
      %s70 = sphi 0, %s69
      %s84 = sphi 0, %s70
      %s90 = sphi 0, %s92
      %s93 = sphi 0, %s90
      %s94 = sphi 0, %s93
      %s110 = sphi 0, %s94
    $region4: #{patch_embed_apply.1} parent=1 // loop_header_branch
      %15 = sbr.rel (%p13) target = $region8
    $region5: #{patch_embed_apply.1} parent=1 // loop_body
      %s17 = ssub.s32 %s12, 1
      %s18 = ssub.s32 %s12, 2
      %s19 = sadd.s32 %s12, 1
      %s20 = ssub.s32 %s12, %s19
      %p21 = scmp.eq.s32.totalorder %s20, 0
      %s23 = sadd.s32 %s22, 1
      %s24 = scalar_select %p21, %s22, %s23
      %p27 = pneg %p21
      %p28 = scmp.eq.s32.totalorder %s12, 7
      %p29 = por %p27, %p28
      %p30 = scmp.ne.s32.totalorder %s22, %s25
      %p31 = scmp.eq.s32.totalorder %s12, 0
      %p32 = por %p30, %p31
      %p33 = scmp.ne.s32.totalorder %s22, %s25
      %p34 = scmp.eq.s32.totalorder %s17, 7
      %p35 = por %p33, %p34
      %p36 = scmp.ne.s32.totalorder %s25, %s26
      %p37 = scmp.eq.s32.totalorder %s17, 0
      %p38 = por %p36, %p37
      %p39 = scmp.ne.s32.totalorder %s25, %s26
      %p40 = scmp.eq.s32.totalorder %s18, 7
      %p41 = por %p39, %p40
      %p43 = scmp.ne.s32.totalorder %s26, %s42
      %p44 = scmp.eq.s32.totalorder %s18, 0
      %p45 = por %p43, %p44
      %s47 = sadd.s32 %s46, 1
      %p50 = scmp.eq.s32.totalorder %s12, 7
      %p51 = scmp.ne.s32.totalorder %s46, %s48
      %p52 = scmp.eq.s32.totalorder %s12, 0
      %p53 = por %p51, %p52
      %p54 = scmp.ne.s32.totalorder %s46, %s48
      %p55 = scmp.eq.s32.totalorder %s17, 7
      %p56 = por %p54, %p55
      %p57 = scmp.ne.s32.totalorder %s48, %s49
      %p58 = scmp.eq.s32.totalorder %s17, 0
      %p59 = por %p57, %p58
      %p60 = scmp.ne.s32.totalorder %s48, %s49
      %p61 = scmp.eq.s32.totalorder %s18, 7
      %p62 = por %p60, %p61
      %p64 = scmp.ne.s32.totalorder %s49, %s63
      %p65 = scmp.eq.s32.totalorder %s18, 0
      %p66 = por %p64, %p65
      %s68 = sadd.s32 %s67, 1
      %p71 = scmp.eq.s32.totalorder %s12, 7
      %p72 = scmp.ne.s32.totalorder %s67, %s69
      %p73 = scmp.eq.s32.totalorder %s12, 0
      %p74 = por %p72, %p73
      %p75 = scmp.ne.s32.totalorder %s67, %s69
      %p76 = scmp.eq.s32.totalorder %s17, 7
      %p77 = por %p75, %p76
      %p78 = scmp.ne.s32.totalorder %s69, %s70
      %p79 = scmp.eq.s32.totalorder %s17, 0
      %p80 = por %p78, %p79
      %p81 = scmp.ne.s32.totalorder %s69, %s70
      %p82 = scmp.eq.s32.totalorder %s18, 7
      %p83 = por %p81, %p82
      %p85 = scmp.ne.s32.totalorder %s70, %s84
      %p86 = scmp.eq.s32.totalorder %s18, 0
      %p87 = por %p85, %p86
      %s88 = ssub.s32 %s12, %s19
      %p89 = scmp.eq.s32.totalorder %s88, 0
      %s91 = sadd.s32 %s90, 1
      %s92 = scalar_select %p89, %s90, %s91
      %p95 = pneg %p89
      %p96 = scmp.eq.s32.totalorder %s12, 7
      %p97 = por %p95, %p96
      %p98 = scmp.ne.s32.totalorder %s90, %s93
      %p99 = scmp.eq.s32.totalorder %s12, 0
      %p100 = por %p98, %p99
      %p101 = scmp.ne.s32.totalorder %s90, %s93
      %p102 = scmp.eq.s32.totalorder %s17, 7
      %p103 = por %p101, %p102
      %p104 = scmp.ne.s32.totalorder %s93, %s94
      %p105 = scmp.eq.s32.totalorder %s17, 0
      %p106 = por %p104, %p105
      %p107 = scmp.ne.s32.totalorder %s93, %s94
      %p108 = scmp.eq.s32.totalorder %s18, 7
      %p109 = por %p107, %p108
      %p111 = scmp.ne.s32.totalorder %s94, %s110
      %p112 = scmp.eq.s32.totalorder %s18, 0
      %p113 = por %p111, %p112
      %p114 = scmp.le.s32.totalorder 1, %s12
      %p115 = scmp.lt.s32.totalorder %s12, 9
      %p116 = pnand %p114, %p115
      %p117 = pneg %p116
      // Predicated region
      $region9: #{patch_embed_apply.1} parent=5 // pred_check
        _
      $region10: #{patch_embed_apply.1} parent=5 // pred_check_branch
        %119 = sbr.rel (%p116) target = $region12
      $region11: #{patch_embed_apply.1} parent=5 // pred_region
        %s120 = ssub.s32 %s12, 1
        // Predicated region
        $region13: #{patch_embed_apply.1} parent=11 // pred_check
          %p121 = pneg %p59
        $region14: #{patch_embed_apply.1} parent=11 // pred_check_branch
          %123 = sbr.rel (%p121) target = $region16
        $region15: #{patch_embed_apply.1} parent=11 // pred_region
          _
        $region16: #{patch_embed_apply.1} parent=11 // pred_fallthru
          _
        // Predicated region
        $region17: #{patch_embed_apply.1} parent=11 // pred_check
          %p124 = pneg %p80
        $region18: #{patch_embed_apply.1} parent=11 // pred_check_branch
          %126 = sbr.rel (%p124) target = $region20
        $region19: #{patch_embed_apply.1} parent=11 // pred_region
          _
        $region20: #{patch_embed_apply.1} parent=11 // pred_fallthru
          _
      $region12: #{patch_embed_apply.1} parent=5 // pred_fallthru
        _
      %p127 = scmp.lt.s32.totalorder %s12, 8
      // Predicated region
      $region21: #{patch_embed_apply.1} parent=5 // pred_check
        %p128 = pneg %p127
      $region22: #{patch_embed_apply.1} parent=5 // pred_check_branch
        %130 = sbr.rel (%p128) target = $region24
      $region23: #{patch_embed_apply.1} parent=5 // pred_region
        // Predicated region
        $region25: #{patch_embed_apply.1} parent=23 // pred_check
          %p131 = pneg %p32
        $region26: #{patch_embed_apply.1} parent=23 // pred_check_branch
          %133 = sbr.rel (%p131) target = $region28
        $region27: #{patch_embed_apply.1} parent=23 // pred_region
          %s134 = smul.u32 4, %s12
          %p135 = scmp.lt.s32.totalorder %s134, 31
          %s136 = scalar_select %p135, %s134, 31
          %s137 = smul.addr %s136, 2
          %s138 = smul.addr %s137, 4
          %s139 = scalar_lea.vmem %s0, %s138
          %s140 = smul.u32 4, %s12
        $region28: #{patch_embed_apply.1} parent=23 // pred_fallthru
          _
      $region24: #{patch_embed_apply.1} parent=5 // pred_fallthru
        _
      %p141 = scmp.le.s32.totalorder 1, %s12
      %p142 = scmp.lt.s32.totalorder %s12, 9
      %p143 = pnand %p141, %p142
      %p144 = pneg %p143
      // Predicated region
      $region29: #{patch_embed_apply.1} parent=5 // pred_check
        _
      $region30: #{patch_embed_apply.1} parent=5 // pred_check_branch
        %146 = sbr.rel (%p143) target = $region32
      $region31: #{patch_embed_apply.1} parent=5 // pred_region
        %s147 = ssub.s32 %s12, 1
        %s148 = smul.u32 4, %s17
        %p149 = scmp.lt.s32.totalorder %s148, 31
        %s150 = scalar_select %p149, %s148, 31
        %s151 = smul.addr %s150, 2
        %s152 = smul.addr %s151, 4
        %s153 = scalar_lea.vmem %s0, %s152
        %p154 = pneg %p38
        %p155 = pneg %p35
        %p156 = pneg %p59
        %p157 = pneg %p56
        %p158 = pneg %p80
        %p159 = pneg %p77
        %p160 = pneg %p106
        %p161 = pneg %p103
        %s162 = sand.u32 %s93, 1
        %s163 = scalar_lea.sflag [#allocation3], %s162
        %s164 = sand.u32 %s93, 1
        %s165 = smul.addr %s164, 128
        %s166 = scalar_lea.vmem [#allocation2], %s165
        %s167 = smul.u32 4, %s17
        %p168 = scmp.lt.s32.totalorder %s167, 31
        %s169 = scalar_select %p168, %s167, 31
        %s170 = smul.addr %s169, 2
        %s171 = smul.addr %s170, 4
        %s172 = scalar_lea.vmem %s0, %s171
        %s173 = smul.u32 4, %s17
        %s174 = smul.u32 4, %s17
        %v175 = vld [vmem:[%s172] sm:$0xff]
        %v176 = vld [vmem:[%s172 + $0x8] sm:$0xff]
        %v177 = vld [vmem:[%s172 + $0x10] sm:$0xff]
        %v178 = vld [vmem:[%s172 + $0x18] sm:$0xff]
        %v179 = vld [vmem:[%s1] sm:$0xff]
        %v180 = vld [vmem:[%s1 + $0x8] sm:$0xff]
        %v181 = vld [vmem:[%s1 + $0x10] sm:$0xff]
        %v182 = vld [vmem:[%s1 + $0x18] sm:$0xff]
        %v183 = vld [vmem:[%s1 + $0x20] sm:$0xff]
        %v184 = vld [vmem:[%s1 + $0x28] sm:$0xff]
        %v185 = vld [vmem:[%s1 + $0x30] sm:$0xff]
        %v186 = vld [vmem:[%s1 + $0x38] sm:$0xff]
        %v187 = vld [vmem:[%s1 + $0x40] sm:$0xff]
        %v188 = vld [vmem:[%s1 + $0x48] sm:$0xff]
        %v189 = vld [vmem:[%s1 + $0x50] sm:$0xff]
        %v190 = vld [vmem:[%s1 + $0x58] sm:$0xff]
        %v191 = vld [vmem:[%s1 + $0x60] sm:$0xff]
        %v192 = vld [vmem:[%s1 + $0x68] sm:$0xff]
        %v193 = vld [vmem:[%s1 + $0x70] sm:$0xff]
        %v194 = vld [vmem:[%s1 + $0x78] sm:$0xff]
        %v195 = vld [vmem:[%s1 + $0x80] sm:$0xff]
        %v196 = vld [vmem:[%s1 + $0x88] sm:$0xff]
        %v197 = vld [vmem:[%s1 + $0x90] sm:$0xff]
        %v198 = vld [vmem:[%s1 + $0x98] sm:$0xff]
        %v199 = vld [vmem:[%s1 + $0xa0] sm:$0xff]
        %v200 = vld [vmem:[%s1 + $0xa8] sm:$0xff]
        %v201 = vld [vmem:[%s1 + $0xb0] sm:$0xff]
        %v202 = vld [vmem:[%s1 + $0xb8] sm:$0xff]
        %v203 = vld [vmem:[%s1 + $0xc0] sm:$0xff]
        %v204 = vld [vmem:[%s1 + $0xc8] sm:$0xff]
        %v205 = vld [vmem:[%s1 + $0xd0] sm:$0xff]
        %v206 = vld [vmem:[%s1 + $0xd8] sm:$0xff]
        %v207 = vld [vmem:[%s1 + $0xe0] sm:$0xff]
        %v208 = vld [vmem:[%s1 + $0xe8] sm:$0xff]
        %v209 = vld [vmem:[%s1 + $0xf0] sm:$0xff]
        %v210 = vld [vmem:[%s1 + $0xf8] sm:$0xff]
        %v211 = vld [vmem:[%s1 + $0x100] sm:$0xff]
        %v212 = vld [vmem:[%s1 + $0x108] sm:$0xff]
        %v213 = vld [vmem:[%s1 + $0x110] sm:$0xff]
        %v214 = vld [vmem:[%s1 + $0x118] sm:$0xff]
        %v215 = vld [vmem:[%s1 + $0x120] sm:$0xff]
        %v216 = vld [vmem:[%s1 + $0x128] sm:$0xff]
        %v217 = vld [vmem:[%s1 + $0x130] sm:$0xff]
        %v218 = vld [vmem:[%s1 + $0x138] sm:$0xff]
        %v219 = vld [vmem:[%s1 + $0x140] sm:$0xff]
        %v220 = vld [vmem:[%s1 + $0x148] sm:$0xff]
        %v221 = vld [vmem:[%s1 + $0x150] sm:$0xff]
        %v222 = vld [vmem:[%s1 + $0x158] sm:$0xff]
        %v223 = vld [vmem:[%s1 + $0x160] sm:$0xff]
        %v224 = vld [vmem:[%s1 + $0x168] sm:$0xff]
        %v225 = vld [vmem:[%s1 + $0x170] sm:$0xff]
        %v226 = vld [vmem:[%s1 + $0x178] sm:$0xff]
        %v227 = vld [vmem:[%s1 + $0x180] sm:$0xff]
        %v228 = vld [vmem:[%s1 + $0x188] sm:$0xff]
        %v229 = vld [vmem:[%s1 + $0x190] sm:$0xff]
        %v230 = vld [vmem:[%s1 + $0x198] sm:$0xff]
        %v231 = vld [vmem:[%s1 + $0x1a0] sm:$0xff]
        %v232 = vld [vmem:[%s1 + $0x1a8] sm:$0xff]
        %v233 = vld [vmem:[%s1 + $0x1b0] sm:$0xff]
        %v234 = vld [vmem:[%s1 + $0x1b8] sm:$0xff]
        %v235 = vld [vmem:[%s1 + $0x1c0] sm:$0xff]
        %v236 = vld [vmem:[%s1 + $0x1c8] sm:$0xff]
        %v237 = vld [vmem:[%s1 + $0x1d0] sm:$0xff]
        %v238 = vld [vmem:[%s1 + $0x1d8] sm:$0xff]
        %v239 = vld [vmem:[%s1 + $0x1e0] sm:$0xff]
        %v240 = vld [vmem:[%s1 + $0x1e8] sm:$0xff]
        %v241 = vld [vmem:[%s1 + $0x1f0] sm:$0xff]
        %v242 = vld [vmem:[%s1 + $0x1f8] sm:$0xff]
        %v243 = vld [vmem:[%s2] sm:$0xf]
        %v245 = vlaneseq
        %v246 = vshrl.u32 %v245, 7
        %v247 = vsub.s32 0, %v246
        %v248 = vrot.slane %v243, %v247
        %v249 = vlaneseq
        %v250 = vshrl.u32 %v249, 7
        %v251 = vsub.s32 1, %v250
        %v252 = vrot.slane %v243, %v251
        %v253 = vlaneseq
        %v254 = vshrl.u32 %v253, 7
        %v255 = vsub.s32 2, %v254
        %v256 = vrot.slane %v243, %v255
        %v257 = vlaneseq
        %v258 = vshrl.u32 %v257, 7
        %v259 = vsub.s32 3, %v258
        %v260 = vrot.slane %v243, %v259
        %v269 = vunpack.c.l.b16 %v175
        %v270 = vunpack.c.h.b16 %v175
        %v271 = vunpack.c.l.b16 %v176
        %v272 = vunpack.c.h.b16 %v176
        %v273 = vunpack.c.l.b16 %v177
        %v274 = vunpack.c.h.b16 %v177
        %v275 = vunpack.c.l.b16 %v178
        %v276 = vunpack.c.h.b16 %v178
        %v277 = vpack.c.b16 %v271, %v269
        %v278 = vpack.c.b16 %v272, %v270
        %v279 = vpack.c.b16 %v275, %v273
        %v280 = vpack.c.b16 %v276, %v274
        %v349 = vunpack.c.l.b16 %v179
        %v350 = vunpack.c.h.b16 %v179
        %v351 = vunpack.c.l.b16 %v180
        %v352 = vunpack.c.h.b16 %v180
        %v353 = vunpack.c.l.b16 %v181
        %v354 = vunpack.c.h.b16 %v181
        %v355 = vunpack.c.l.b16 %v182
        %v356 = vunpack.c.h.b16 %v182
        %v357 = vunpack.c.l.b16 %v183
        %v358 = vunpack.c.h.b16 %v183
        %v359 = vunpack.c.l.b16 %v184
        %v360 = vunpack.c.h.b16 %v184
        %v361 = vunpack.c.l.b16 %v185
        %v362 = vunpack.c.h.b16 %v185
        %v363 = vunpack.c.l.b16 %v186
        %v364 = vunpack.c.h.b16 %v186
        %v365 = vunpack.c.l.b16 %v187
        %v366 = vunpack.c.h.b16 %v187
        %v367 = vunpack.c.l.b16 %v188
        %v368 = vunpack.c.h.b16 %v188
        %v369 = vunpack.c.l.b16 %v189
        %v370 = vunpack.c.h.b16 %v189
        %v371 = vunpack.c.l.b16 %v190
        %v372 = vunpack.c.h.b16 %v190
        %v373 = vunpack.c.l.b16 %v191
        %v374 = vunpack.c.h.b16 %v191
        %v375 = vunpack.c.l.b16 %v192
        %v376 = vunpack.c.h.b16 %v192
        %v377 = vunpack.c.l.b16 %v193
        %v378 = vunpack.c.h.b16 %v193
        %v379 = vunpack.c.l.b16 %v194
        %v380 = vunpack.c.h.b16 %v194
        %v381 = vunpack.c.l.b16 %v195
        %v382 = vunpack.c.h.b16 %v195
        %v383 = vunpack.c.l.b16 %v196
        %v384 = vunpack.c.h.b16 %v196
        %v385 = vunpack.c.l.b16 %v197
        %v386 = vunpack.c.h.b16 %v197
        %v387 = vunpack.c.l.b16 %v198
        %v388 = vunpack.c.h.b16 %v198
        %v389 = vunpack.c.l.b16 %v199
        %v390 = vunpack.c.h.b16 %v199
        %v391 = vunpack.c.l.b16 %v200
        %v392 = vunpack.c.h.b16 %v200
        %v393 = vunpack.c.l.b16 %v201
        %v394 = vunpack.c.h.b16 %v201
        %v395 = vunpack.c.l.b16 %v202
        %v396 = vunpack.c.h.b16 %v202
        %v397 = vunpack.c.l.b16 %v203
        %v398 = vunpack.c.h.b16 %v203
        %v399 = vunpack.c.l.b16 %v204
        %v400 = vunpack.c.h.b16 %v204
        %v401 = vunpack.c.l.b16 %v205
        %v402 = vunpack.c.h.b16 %v205
        %v403 = vunpack.c.l.b16 %v206
        %v404 = vunpack.c.h.b16 %v206
        %v405 = vunpack.c.l.b16 %v207
        %v406 = vunpack.c.h.b16 %v207
        %v407 = vunpack.c.l.b16 %v208
        %v408 = vunpack.c.h.b16 %v208
        %v409 = vunpack.c.l.b16 %v209
        %v410 = vunpack.c.h.b16 %v209
        %v411 = vunpack.c.l.b16 %v210
        %v412 = vunpack.c.h.b16 %v210
        %v413 = vunpack.c.l.b16 %v211
        %v414 = vunpack.c.h.b16 %v211
        %v415 = vunpack.c.l.b16 %v212
        %v416 = vunpack.c.h.b16 %v212
        %v417 = vunpack.c.l.b16 %v213
        %v418 = vunpack.c.h.b16 %v213
        %v419 = vunpack.c.l.b16 %v214
        %v420 = vunpack.c.h.b16 %v214
        %v421 = vunpack.c.l.b16 %v215
        %v422 = vunpack.c.h.b16 %v215
        %v423 = vunpack.c.l.b16 %v216
        %v424 = vunpack.c.h.b16 %v216
        %v425 = vunpack.c.l.b16 %v217
        %v426 = vunpack.c.h.b16 %v217
        %v427 = vunpack.c.l.b16 %v218
        %v428 = vunpack.c.h.b16 %v218
        %v429 = vunpack.c.l.b16 %v219
        %v430 = vunpack.c.h.b16 %v219
        %v431 = vunpack.c.l.b16 %v220
        %v432 = vunpack.c.h.b16 %v220
        %v433 = vunpack.c.l.b16 %v221
        %v434 = vunpack.c.h.b16 %v221
        %v435 = vunpack.c.l.b16 %v222
        %v436 = vunpack.c.h.b16 %v222
        %v437 = vunpack.c.l.b16 %v223
        %v438 = vunpack.c.h.b16 %v223
        %v439 = vunpack.c.l.b16 %v224
        %v440 = vunpack.c.h.b16 %v224
        %v441 = vunpack.c.l.b16 %v225
        %v442 = vunpack.c.h.b16 %v225
        %v443 = vunpack.c.l.b16 %v226
        %v444 = vunpack.c.h.b16 %v226
        %v445 = vunpack.c.l.b16 %v227
        %v446 = vunpack.c.h.b16 %v227
        %v447 = vunpack.c.l.b16 %v228
        %v448 = vunpack.c.h.b16 %v228
        %v449 = vunpack.c.l.b16 %v229
        %v450 = vunpack.c.h.b16 %v229
        %v451 = vunpack.c.l.b16 %v230
        %v452 = vunpack.c.h.b16 %v230
        %v453 = vunpack.c.l.b16 %v231
        %v454 = vunpack.c.h.b16 %v231
        %v455 = vunpack.c.l.b16 %v232
        %v456 = vunpack.c.h.b16 %v232
        %v457 = vunpack.c.l.b16 %v233
        %v458 = vunpack.c.h.b16 %v233
        %v459 = vunpack.c.l.b16 %v234
        %v460 = vunpack.c.h.b16 %v234
        %v461 = vunpack.c.l.b16 %v235
        %v462 = vunpack.c.h.b16 %v235
        %v463 = vunpack.c.l.b16 %v236
        %v464 = vunpack.c.h.b16 %v236
        %v465 = vunpack.c.l.b16 %v237
        %v466 = vunpack.c.h.b16 %v237
        %v467 = vunpack.c.l.b16 %v238
        %v468 = vunpack.c.h.b16 %v238
        %v469 = vunpack.c.l.b16 %v239
        %v470 = vunpack.c.h.b16 %v239
        %v471 = vunpack.c.l.b16 %v240
        %v472 = vunpack.c.h.b16 %v240
        %v473 = vunpack.c.l.b16 %v241
        %v474 = vunpack.c.h.b16 %v241
        %v475 = vunpack.c.l.b16 %v242
        %v476 = vunpack.c.h.b16 %v242
        %v477 = vpack.c.b16 %v353, %v349
        %v478 = vpack.c.b16 %v354, %v350
        %v479 = vpack.c.b16 %v355, %v351
        %v480 = vpack.c.b16 %v356, %v352
        %v481 = vpack.c.b16 %v361, %v357
        %v482 = vpack.c.b16 %v362, %v358
        %v483 = vpack.c.b16 %v363, %v359
        %v484 = vpack.c.b16 %v364, %v360
        %v485 = vpack.c.b16 %v369, %v365
        %v486 = vpack.c.b16 %v370, %v366
        %v487 = vpack.c.b16 %v371, %v367
        %v488 = vpack.c.b16 %v372, %v368
        %v489 = vpack.c.b16 %v377, %v373
        %v490 = vpack.c.b16 %v378, %v374
        %v491 = vpack.c.b16 %v379, %v375
        %v492 = vpack.c.b16 %v380, %v376
        %v493 = vpack.c.b16 %v385, %v381
        %v494 = vpack.c.b16 %v386, %v382
        %v495 = vpack.c.b16 %v387, %v383
        %v496 = vpack.c.b16 %v388, %v384
        %v497 = vpack.c.b16 %v393, %v389
        %v498 = vpack.c.b16 %v394, %v390
        %v499 = vpack.c.b16 %v395, %v391
        %v500 = vpack.c.b16 %v396, %v392
        %v501 = vpack.c.b16 %v401, %v397
        %v502 = vpack.c.b16 %v402, %v398
        %v503 = vpack.c.b16 %v403, %v399
        %v504 = vpack.c.b16 %v404, %v400
        %v505 = vpack.c.b16 %v409, %v405
        %v506 = vpack.c.b16 %v410, %v406
        %v507 = vpack.c.b16 %v411, %v407
        %v508 = vpack.c.b16 %v412, %v408
        %v509 = vpack.c.b16 %v417, %v413
        %v510 = vpack.c.b16 %v418, %v414
        %v511 = vpack.c.b16 %v419, %v415
        %v512 = vpack.c.b16 %v420, %v416
        %v513 = vpack.c.b16 %v425, %v421
        %v514 = vpack.c.b16 %v426, %v422
        %v515 = vpack.c.b16 %v427, %v423
        %v516 = vpack.c.b16 %v428, %v424
        %v517 = vpack.c.b16 %v433, %v429
        %v518 = vpack.c.b16 %v434, %v430
        %v519 = vpack.c.b16 %v435, %v431
        %v520 = vpack.c.b16 %v436, %v432
        %v521 = vpack.c.b16 %v441, %v437
        %v522 = vpack.c.b16 %v442, %v438
        %v523 = vpack.c.b16 %v443, %v439
        %v524 = vpack.c.b16 %v444, %v440
        %v525 = vpack.c.b16 %v449, %v445
        %v526 = vpack.c.b16 %v450, %v446
        %v527 = vpack.c.b16 %v451, %v447
        %v528 = vpack.c.b16 %v452, %v448
        %v529 = vpack.c.b16 %v457, %v453
        %v530 = vpack.c.b16 %v458, %v454
        %v531 = vpack.c.b16 %v459, %v455
        %v532 = vpack.c.b16 %v460, %v456
        %v533 = vpack.c.b16 %v465, %v461
        %v534 = vpack.c.b16 %v466, %v462
        %v535 = vpack.c.b16 %v467, %v463
        %v536 = vpack.c.b16 %v468, %v464
        %v537 = vpack.c.b16 %v473, %v469
        %v538 = vpack.c.b16 %v474, %v470
        %v539 = vpack.c.b16 %v475, %v471
        %v540 = vpack.c.b16 %v476, %v472
        %605 = vmatprep.subr.bf16.mxu0 %v478
        %606 = vmatpush1.bf16.msra.mxu0 %v477
        %607 = vmatprep.subr.bf16.mxu0 %v482
        %608 = vmatpush1.bf16.msra.mxu0 %v481
        %609 = vmatprep.subr.bf16.mxu0 %v486
        %610 = vmatpush1.bf16.msra.mxu0 %v485
        %611 = vmatprep.subr.bf16.mxu0 %v490
        %612 = vmatpush1.bf16.msra.mxu0 %v489
        %613 = vmatprep.subr.bf16.mxu0 %v494
        %614 = vmatpush1.bf16.msra.mxu0 %v493
        %615 = vmatprep.subr.bf16.mxu0 %v498
        %616 = vmatpush1.bf16.msra.mxu0 %v497
        %617 = vmatprep.subr.bf16.mxu0 %v502
        %618 = vmatpush1.bf16.msra.mxu0 %v501
        %619 = vmatprep.subr.bf16.mxu0 %v506
        %620 = vmatpush1.bf16.msra.mxu0 %v505
        %621 = vmatprep.subr.bf16.mxu0 %v510
        %622 = vmatpush1.bf16.msra.mxu0 %v509
        %623 = vmatprep.subr.bf16.mxu0 %v514
        %624 = vmatpush1.bf16.msra.mxu0 %v513
        %625 = vmatprep.subr.bf16.mxu0 %v518
        %626 = vmatpush1.bf16.msra.mxu0 %v517
        %627 = vmatprep.subr.bf16.mxu0 %v522
        %628 = vmatpush1.bf16.msra.mxu0 %v521
        %629 = vmatprep.subr.bf16.mxu0 %v526
        %630 = vmatpush1.bf16.msra.mxu0 %v525
        %631 = vmatprep.subr.bf16.mxu0 %v530
        %632 = vmatpush1.bf16.msra.mxu0 %v529
        %633 = vmatprep.subr.bf16.mxu0 %v534
        %634 = vmatpush1.bf16.msra.mxu0 %v533
        %635 = vmatprep.subr.bf16.mxu0 %v538
        %636 = vmatpush1.bf16.msra.mxu0 %v537
        %637 = vmatprep.mubr.bf16.mxu0 %v278
        %638 = vmatmul.mubr.bf16.gmra.mrb[0].mxu0 %v277
        %v639 = vpop.f32.mrb[0].mxu0
        %v640 = vadd.f32 %v248, %v639
        %v641 = vpop.f32.mrb[0].mxu0
        %v642 = vadd.f32 %v252, %v641
        %v643 = vpop.f32.mrb[0].mxu0
        %v644 = vadd.f32 %v248, %v643
        %v645 = vpop.f32.mrb[0].mxu0
        %v646 = vadd.f32 %v252, %v645
        %647 = vmatprep.mubr.bf16.mxu0 %v280
        %648 = vmatmul.mubr.bf16.gmra.mrb[0].mxu0 %v279
        %v649 = vpop.f32.mrb[0].mxu0
        %v650 = vadd.f32 %v248, %v649
        %v651 = vpop.f32.mrb[0].mxu0
        %v652 = vadd.f32 %v252, %v651
        %v653 = vpop.f32.mrb[0].mxu0
        %v654 = vadd.f32 %v248, %v653
        %v655 = vpop.f32.mrb[0].mxu0
        %v656 = vadd.f32 %v252, %v655
        %657 = vdwg.mxu0
        %658 = vmatprep.subr.bf16.mxu0 %v480
        %659 = vmatpush1.bf16.msra.mxu0 %v479
        %660 = vmatprep.subr.bf16.mxu0 %v484
        %661 = vmatpush1.bf16.msra.mxu0 %v483
        %662 = vmatprep.subr.bf16.mxu0 %v488
        %663 = vmatpush1.bf16.msra.mxu0 %v487
        %664 = vmatprep.subr.bf16.mxu0 %v492
        %665 = vmatpush1.bf16.msra.mxu0 %v491
        %666 = vmatprep.subr.bf16.mxu0 %v496
        %667 = vmatpush1.bf16.msra.mxu0 %v495
        %668 = vmatprep.subr.bf16.mxu0 %v500
        %669 = vmatpush1.bf16.msra.mxu0 %v499
        %670 = vmatprep.subr.bf16.mxu0 %v504
        %671 = vmatpush1.bf16.msra.mxu0 %v503
        %672 = vmatprep.subr.bf16.mxu0 %v508
        %673 = vmatpush1.bf16.msra.mxu0 %v507
        %674 = vmatprep.subr.bf16.mxu0 %v512
        %675 = vmatpush1.bf16.msra.mxu0 %v511
        %676 = vmatprep.subr.bf16.mxu0 %v516
        %677 = vmatpush1.bf16.msra.mxu0 %v515
        %678 = vmatprep.subr.bf16.mxu0 %v520
        %679 = vmatpush1.bf16.msra.mxu0 %v519
        %680 = vmatprep.subr.bf16.mxu0 %v524
        %681 = vmatpush1.bf16.msra.mxu0 %v523
        %682 = vmatprep.subr.bf16.mxu0 %v528
        %683 = vmatpush1.bf16.msra.mxu0 %v527
        %684 = vmatprep.subr.bf16.mxu0 %v532
        %685 = vmatpush1.bf16.msra.mxu0 %v531
        %686 = vmatprep.subr.bf16.mxu0 %v536
        %687 = vmatpush1.bf16.msra.mxu0 %v535
        %688 = vmatprep.subr.bf16.mxu0 %v540
        %689 = vmatpush1.bf16.msra.mxu0 %v539
        %690 = vmatprep.mubr.bf16.mxu0 %v278
        %691 = vmatmul.mubr.bf16.gmra.mrb[0].mxu0 %v277
        %v692 = vpop.f32.mrb[0].mxu0
        %v693 = vadd.f32 %v256, %v692
        %v694 = vpop.f32.mrb[0].mxu0
        %v695 = vadd.f32 %v260, %v694
        %v696 = vpop.f32.mrb[0].mxu0
        %v697 = vadd.f32 %v256, %v696
        %v698 = vpop.f32.mrb[0].mxu0
        %v699 = vadd.f32 %v260, %v698
        %700 = vmatprep.mubr.bf16.mxu0 %v280
        %701 = vmatmul.mubr.bf16.gmra.mrb[0].mxu0 %v279
        %v702 = vpop.f32.mrb[0].mxu0
        %v703 = vadd.f32 %v256, %v702
        %v704 = vpop.f32.mrb[0].mxu0
        %v705 = vadd.f32 %v260, %v704
        %v706 = vpop.f32.mrb[0].mxu0
        %v707 = vadd.f32 %v256, %v706
        %v708 = vpop.f32.mrb[0].mxu0
        %v709 = vadd.f32 %v260, %v708
        %710 = vdwg.mxu0
        %711 = vst [vmem:[%s166] sm:$0xff] %v640
        %712 = vst [vmem:[%s166 + $0x8] sm:$0xff] %v642
        %713 = vst [vmem:[%s166 + $0x10] sm:$0xff] %v693
        %714 = vst [vmem:[%s166 + $0x18] sm:$0xff] %v695
        %715 = vst [vmem:[%s166 + $0x20] sm:$0xff] %v644
        %716 = vst [vmem:[%s166 + $0x28] sm:$0xff] %v646
        %717 = vst [vmem:[%s166 + $0x30] sm:$0xff] %v697
        %718 = vst [vmem:[%s166 + $0x38] sm:$0xff] %v699
        %719 = vst [vmem:[%s166 + $0x40] sm:$0xff] %v650
        %720 = vst [vmem:[%s166 + $0x48] sm:$0xff] %v652
        %721 = vst [vmem:[%s166 + $0x50] sm:$0xff] %v703
        %722 = vst [vmem:[%s166 + $0x58] sm:$0xff] %v705
        %723 = vst [vmem:[%s166 + $0x60] sm:$0xff] %v654
        %724 = vst [vmem:[%s166 + $0x68] sm:$0xff] %v656
        %725 = vst [vmem:[%s166 + $0x70] sm:$0xff] %v707
        %726 = vst [vmem:[%s166 + $0x78] sm:$0xff] %v709
        %s727 = sand.u32 %s93, 1
        %s728 = scalar_lea.sflag [#allocation3], %s727
        %s729 = sand.u32 %s93, 1
        %s730 = smul.addr %s729, 128
        %s731 = scalar_lea.vmem [#allocation2], %s730
        // Predicated region
        $region33: #{patch_embed_apply.1} parent=31 // pred_check
          %p732 = pneg %p103
        $region34: #{patch_embed_apply.1} parent=31 // pred_check_branch
          %734 = sbr.rel (%p732) target = $region36
        $region35: #{patch_embed_apply.1} parent=31 // pred_region
          %s735 = smul.u32 4, %s17
          %s737 = ssub.s32 2048, 2048
          %738 = vsyncadd %s728, %s737
          %s739 = smul.addr %s735, 4
          %s740 = smul.addr %s739, 128
          %s741 = scalar_lea.hbm %s3, %s740
          %s742 = sshll.u32 %s731, 4
          %s743 = int_to_ptr.vmem [resolvable:$true] %s742
          %748 = dma.vmem_to_hbm [thread:$0]  %s743, 2048, %s741, %s728, 512, 512, 32
        $region36: #{patch_embed_apply.1} parent=31 // pred_fallthru
          _
      $region32: #{patch_embed_apply.1} parent=5 // pred_fallthru
        _
      %p749 = scmp.le.s32.totalorder 2, %s12
      // Predicated region
      $region37: #{patch_embed_apply.1} parent=5 // pred_check
        %p750 = pneg %p749
      $region38: #{patch_embed_apply.1} parent=5 // pred_check_branch
        %752 = sbr.rel (%p750) target = $region40
      $region39: #{patch_embed_apply.1} parent=5 // pred_region
        %s753 = ssub.s32 %s12, 2
        // Predicated region
        $region41: #{patch_embed_apply.1} parent=39 // pred_check
          %p754 = pneg %p109
        $region42: #{patch_embed_apply.1} parent=39 // pred_check_branch
          %756 = sbr.rel (%p754) target = $region44
        $region43: #{patch_embed_apply.1} parent=39 // pred_region
          %s757 = sand.u32 %s94, 1
          %s758 = scalar_lea.sflag [#allocation3], %s757
          %s759 = sand.u32 %s94, 1
          %s760 = smul.addr %s759, 128
          %s761 = scalar_lea.vmem [#allocation2], %s760
          %762 = dma.done %s758, 2048
        $region44: #{patch_embed_apply.1} parent=39 // pred_fallthru
          _
      $region40: #{patch_embed_apply.1} parent=5 // pred_fallthru
        _
    $region6: #{patch_embed_apply.1} parent=1 // loop_footer
      %s16 = sadd.s32 1, %s12
    $region7: #{patch_embed_apply.1} parent=1 // loop_footer_branch
      %11 = sbr.rel target = $region3
    $region8: #{patch_embed_apply.1} parent=1 // loop_exit
      _
    %763 = vsyncpa [#allocation3], 1
    %s764 = scalar_lea.sflag [#allocation3], 1
    %765 = vsyncpa %s764, 1

</llo_original>
